<compile_context>
chip_gen: v5e
topology: v5e:2x2
jax: 0.10.0
libtpu: 0.0.40
codegen_flags: <defaults>
</compile_context>

<pallas_src>
import functools

import jax
import jax.numpy as jnp
from jax.experimental import pallas as pl
from jax.experimental.pallas import tpu as pltpu

LANE = 128     # TPU vreg lane width
SUBLANE = 8    # TPU vreg sublane count (f32)


def _round_up(x, m):
    return ((x + m - 1) // m) * m


def _cdiv(a, b):
    return (a + b - 1) // b


def _vmem_capacity_bytes():
    """Physical VMEM per core (v5e/v6e 128 MiB, v7x 64 MiB); conservative fallback."""
    try:
        return int(pltpu.get_tpu_info().vmem_capacity_bytes)
    except Exception:
        return 64 * 1024 * 1024


def _mlp_fused_kernel(*refs, n_layers, activation):
    """Fused MLP: refs = (x_ref, w0, b0, w1, b1, ..., w_{L-1}, b_{L-1}, o_ref).

    x_ref: (TM, K0p) f32; w_i: (Kip, Nip) bf16; b_i: (1, Nip) f32; o: (TM, NLp).
    Hidden layers apply `activation`; the output layer does not (matches the
    PyTorch module).  bf16 MXU inputs, f32 accumulation / bias / activation.
    """
    x_ref = refs[0]
    o_ref = refs[-1]
    h = x_ref[...].astype(jnp.float32)
    for i in range(n_layers):
        w = refs[1 + 2 * i][...]          # bf16 (Kip, Nip), resident in VMEM
        b = refs[2 + 2 * i][...]          # f32  (1,  Nip), broadcast over rows
        h = jnp.dot(h.astype(jnp.bfloat16), w,
                    preferred_element_type=jnp.float32) + b
        if i != n_layers - 1:
            if activation == "relu":
                h = jnp.maximum(h, 0.0)
            elif activation == "tanh":
                h = jnp.tanh(h)           # f32 (v5e has no bf16 VPU/EUP)
            else:
                raise ValueError(f"unsupported activation: {activation}")
    o_ref[...] = h.astype(o_ref.dtype)


def mlp_forward_pallas(x, padded_weights, padded_biases, activation, out_features):
    """x: (M, K_in) f32.  padded_weights[i]: (Kip, Nip) bf16, padded_biases[i]: (1, Nip) f32.

    Returns (M, out_features) f32.
    """
    M, K = x.shape
    n_layers = len(padded_weights)
    K_pad = padded_weights[0].shape[0]        # round_up(K, 8), not 128
    N_out_pad = padded_weights[-1].shape[1]   # round_up(out_features, 128)

    # --- Batch tile: minimize last-tile waste, guarantee >= 2 grid steps so the
    # "parallel" axis can shard across v7x's two TensorCores (when M allows it).
    M8 = _round_up(M, SUBLANE)
    n_tiles = max(2, _cdiv(M8, 256)) if M8 >= 2 * SUBLANE else 1
    TM = _round_up(_cdiv(M8, n_tiles), SUBLANE)

    # --- VMEM accounting: resident params (single-buffered), double-buffered
    # x/out tiles, per-layer f32 intermediates + bf16 copies.
    def _vmem_bytes(tm):
        params = sum(w.size * 2 + b.size * 4
                     for w, b in zip(padded_weights, padded_biases))
        x_tiles = 2 * tm * K_pad * x.dtype.itemsize
        o_tiles = 2 * tm * N_out_pad * 4
        inter = sum(tm * w.shape[1] * (4 + 2) for w in padded_weights)
        return params + x_tiles + o_tiles + inter

    cap = _vmem_capacity_bytes()
    budget = int(0.80 * cap)
    while TM > SUBLANE and _vmem_bytes(TM) > budget:
        TM = _round_up(TM // 2, SUBLANE)

    M_pad = _round_up(M, TM)
    grid = (M_pad // TM,)

    # Input: only row padding to M_pad and sublane (8) padding on K — no 128-wide
    # K inflation.  Skip the copy entirely when no padding is needed.
    if M_pad == M and K_pad == K:
        x_in = x
    else:
        x_in = jnp.zeros((M_pad, K_pad), x.dtype).at[:M, :K].set(x)

    def _build_specs(use_buffered):
        in_specs = [
            pl.BlockSpec((TM, K_pad), lambda i: (i, 0),
                         memory_space=pltpu.MemorySpace.VMEM)
        ]
        pkw = {"pipeline_mode": pl.Buffered(1)} if use_buffered else {}
        for w, b in zip(padded_weights, padded_biases):
            in_specs.append(pl.BlockSpec(w.shape, lambda i: (0, 0),
                                         memory_space=pltpu.MemorySpace.VMEM, **pkw))
            in_specs.append(pl.BlockSpec(b.shape, lambda i: (0, 0),
                                         memory_space=pltpu.MemorySpace.VMEM, **pkw))
        out_specs = pl.BlockSpec((TM, N_out_pad), lambda i: (i, 0),
                                 memory_space=pltpu.MemorySpace.VMEM)
        return in_specs, out_specs

    params = []
    for w, b in zip(padded_weights, padded_biases):
        params.extend([w, b])

    # Advisory cost hint for XLA's scheduler.
    flops = sum(2 * M_pad * w.shape[0] * w.shape[1] for w in padded_weights)
    transcendentals = (
        sum(M_pad * w.shape[1] for w in padded_weights[:-1])
        if activation == "tanh" else 0
    )
    bytes_accessed = (
        x_in.size * x_in.dtype.itemsize
        + sum(w.size * 2 + b.size * 4 for w, b in zip(padded_weights, padded_biases))
        + M_pad * N_out_pad * 4
    )

    vmem_limit = int(min(cap, max(32 * 1024 * 1024,
                                  _vmem_bytes(TM) + 8 * 1024 * 1024)))

    kernel = functools.partial(
        _mlp_fused_kernel, n_layers=n_layers, activation=activation
    )

    def _call(use_buffered):
        in_specs, out_specs = _build_specs(use_buffered)
        return pl.pallas_call(
            kernel,
            out_shape=jax.ShapeDtypeStruct((M_pad, N_out_pad), jnp.float32),
            grid=grid,
            in_specs=in_specs,
            out_specs=out_specs,
            compiler_params=pltpu.CompilerParams(
                dimension_semantics=("parallel",),   # batch tiles split across TCs
                vmem_limit_bytes=vmem_limit,
            ),
            cost_estimate=pl.CostEstimate(
                flops=flops,
                transcendentals=transcendentals,
                bytes_accessed=bytes_accessed,
            ),
        )(x_in, *params)

    try:
        out_pad = _call(use_buffered=True)       # single-buffered resident params
    except Exception:
        out_pad = _call(use_buffered=False)      # fallback: default pipelining

    return out_pad[:M, :out_features]


class MLPPallas:
    """Mirror of fastNLP MLP: hidden layers with activation, output layer without."""

    def __init__(self, size_layer, activation="relu", key=None):
        if activation not in ("relu", "tanh"):
            raise ValueError(f"should set activation correctly: {activation}")
        self.activation = activation
        self.out_features = size_layer[-1]
        if key is None:
            key = jax.random.PRNGKey(0)

        self.weights = []         # true (unpadded) f32 params, for the reference check
        self.biases = []
        self.padded_weights = []  # padded, bf16 (MXU inputs), built once (hoisted)
        self.padded_biases = []   # (1, N_pad) f32, built once (hoisted)

        # Deterministic init matching PyTorch nn.Linear default scheme
        # (uniform(-1/sqrt(in), 1/sqrt(in))) — synthetic weights, not a checkpoint.
        n_layers = len(size_layer) - 1
        for i in range(1, len(size_layer)):
            fan_in, fan_out = size_layer[i - 1], size_layer[i]
            key, kw, kb = jax.random.split(key, 3)
            bound = 1.0 / (fan_in ** 0.5)
            w = jax.random.uniform(kw, (fan_in, fan_out), jnp.float32,
                                   minval=-bound, maxval=bound)
            b = jax.random.uniform(kb, (fan_out,), jnp.float32,
                                   minval=-bound, maxval=bound)
            self.weights.append(w)
            self.biases.append(b)

            # First layer: K (sublane) dim only needs a multiple of 8 (matches
            # the unpadded-K input).  Later layers: K equals the previous
            # layer's 128-padded output width.
            k_pad = _round_up(fan_in, SUBLANE if i == 1 else LANE)
            n_pad = _round_up(fan_out, LANE)
            wp = (jnp.zeros((k_pad, n_pad), jnp.float32)
                  .at[:fan_in, :fan_out].set(w)).astype(jnp.bfloat16)
            bp = jnp.zeros((1, n_pad), jnp.float32).at[0, :fan_out].set(b)
            self.padded_weights.append(wp)
            self.padded_biases.append(bp)
        assert len(self.padded_weights) == n_layers

    def __call__(self, x):
        return mlp_forward_pallas(
            x, self.padded_weights, self.padded_biases,
            self.activation, self.out_features,
        )


def _reference(mlp, x):
    """Plain-JAX f32 reference (module semantics); kernel uses bf16 MXU inputs,
    so comparison tolerances are loosened accordingly."""
    n = len(mlp.weights)
    for i in range(n):
        x = x @ mlp.weights[i] + mlp.biases[i]
        if i != n - 1:
            x = jnp.maximum(x, 0.0) if mlp.activation == "relu" else jnp.tanh(x)
    return x


if __name__ == "__main__":
    key = jax.random.PRNGKey(0)
    key, kx = jax.random.split(key)

    size_layer = [32, 64, 64, 16]   # in -> hidden -> hidden -> out
    batch = 8
    x = jax.random.normal(kx, (batch, size_layer[0]), jnp.float32)

    # relu MLP
    mlp_relu = MLPPallas(size_layer, activation="relu", key=key)
    out = jax.block_until_ready(mlp_relu(x))
    ref = _reference(mlp_relu, x)
    assert out.shape == (batch, size_layer[-1])
    assert jnp.allclose(out, ref, atol=5e-2, rtol=5e-2), "relu mismatch vs reference"

    # tanh MLP (exercise the other activation path)
    mlp_tanh = MLPPallas(size_layer, activation="tanh", key=key)
    out_t = jax.block_until_ready(mlp_tanh(x))
    ref_t = _reference(mlp_tanh, x)
    assert jnp.allclose(out_t, ref_t, atol=5e-2, rtol=5e-2), "tanh mismatch vs reference"

    # Larger batch path: exercises multi-step grid (>=2 tiles for TC sharding).
    xb = jax.random.normal(kx, (300, size_layer[0]), jnp.float32)
    out_b = jax.block_until_ready(mlp_relu(xb))
    ref_b = _reference(mlp_relu, xb)
    assert out_b.shape == (300, size_layer[-1])
    assert jnp.allclose(out_b, ref_b, atol=5e-2, rtol=5e-2), "batched mismatch vs reference"

    print("KERNEL_OK")
</pallas_src>

<mosaic_0001>
module attributes {stable_mosaic.version = 11 : i64} {
  func.func @_mlp_fused_kernel(%arg0: i32, %arg1: memref<8x32xf32, #tpu.memory_space<vmem>>, %arg2: memref<32x128xbf16, #tpu.memory_space<vmem>>, %arg3: memref<1x128xf32, #tpu.memory_space<vmem>>, %arg4: memref<128x128xbf16, #tpu.memory_space<vmem>>, %arg5: memref<1x128xf32, #tpu.memory_space<vmem>>, %arg6: memref<128x128xbf16, #tpu.memory_space<vmem>>, %arg7: memref<1x128xf32, #tpu.memory_space<vmem>>, %arg8: memref<8x128xf32, #tpu.memory_space<vmem>>) attributes {dimension_semantics = [#tpu.dimension_semantics<parallel>], iteration_bounds = array<i64: 1>, scalar_prefetch = 0 : i64, scratch_operands = 0 : i64, tpu.core_type = #tpu.core_type<tc>, window_params = [{transform_indices = @transform_0, window_bounds = array<i64: 8, 32>}, {pipeline_mode = #tpu.pipeline_mode<synchronous>, transform_indices = @transform_1, window_bounds = array<i64: 32, 128>}, {pipeline_mode = #tpu.pipeline_mode<synchronous>, transform_indices = @transform_2, window_bounds = array<i64: 1, 128>}, {pipeline_mode = #tpu.pipeline_mode<synchronous>, transform_indices = @transform_3, window_bounds = array<i64: 128, 128>}, {pipeline_mode = #tpu.pipeline_mode<synchronous>, transform_indices = @transform_4, window_bounds = array<i64: 1, 128>}, {pipeline_mode = #tpu.pipeline_mode<synchronous>, transform_indices = @transform_5, window_bounds = array<i64: 128, 128>}, {pipeline_mode = #tpu.pipeline_mode<synchronous>, transform_indices = @transform_6, window_bounds = array<i64: 1, 128>}, {transform_indices = @transform_7, window_bounds = array<i64: 8, 128>}]} {
    %c0 = arith.constant 0 : index
    %c0_0 = arith.constant 0 : index
    %0 = vector.load %arg1[%c0, %c0_0] : memref<8x32xf32, #tpu.memory_space<vmem>>, vector<8x32xf32>
    %c0_1 = arith.constant 0 : index
    %c0_2 = arith.constant 0 : index
    %1 = vector.load %arg2[%c0_1, %c0_2] : memref<32x128xbf16, #tpu.memory_space<vmem>>, vector<32x128xbf16>
    %c0_3 = arith.constant 0 : index
    %c0_4 = arith.constant 0 : index
    %2 = vector.load %arg3[%c0_3, %c0_4] : memref<1x128xf32, #tpu.memory_space<vmem>>, vector<1x128xf32>
    %3 = arith.truncf %0 : vector<8x32xf32> to vector<8x32xbf16>
    %cst = arith.constant dense<0.000000e+00> : vector<8x128xf32>
    %4 = tpu.matmul %3, %1, %cst {dimension_numbers = #tpu.dot_dimension_numbers<[1], [0], [0], [1], [0, 0, 1, 1], [], []>} : vector<8x32xbf16>, vector<32x128xbf16>, vector<8x128xf32> -> vector<8x128xf32>
    %5 = vector.broadcast %2 : vector<1x128xf32> to vector<8x128xf32>
    %6 = arith.addf %4, %5 : vector<8x128xf32>
    %cst_5 = arith.constant 0.000000e+00 : f32
    %7 = vector.broadcast %cst_5 : f32 to vector<8x128xf32>
    %8 = arith.maximumf %6, %7 : vector<8x128xf32>
    %c0_6 = arith.constant 0 : index
    %c0_7 = arith.constant 0 : index
    %9 = vector.load %arg4[%c0_6, %c0_7] : memref<128x128xbf16, #tpu.memory_space<vmem>>, vector<128x128xbf16>
    %c0_8 = arith.constant 0 : index
    %c0_9 = arith.constant 0 : index
    %10 = vector.load %arg5[%c0_8, %c0_9] : memref<1x128xf32, #tpu.memory_space<vmem>>, vector<1x128xf32>
    %11 = arith.truncf %8 : vector<8x128xf32> to vector<8x128xbf16>
    %cst_10 = arith.constant dense<0.000000e+00> : vector<8x128xf32>
    %12 = tpu.matmul %11, %9, %cst_10 {dimension_numbers = #tpu.dot_dimension_numbers<[1], [0], [0], [1], [0, 0, 1, 1], [], []>} : vector<8x128xbf16>, vector<128x128xbf16>, vector<8x128xf32> -> vector<8x128xf32>
    %13 = vector.broadcast %10 : vector<1x128xf32> to vector<8x128xf32>
    %14 = arith.addf %12, %13 : vector<8x128xf32>
    %cst_11 = arith.constant 0.000000e+00 : f32
    %15 = vector.broadcast %cst_11 : f32 to vector<8x128xf32>
    %16 = arith.maximumf %14, %15 : vector<8x128xf32>
    %c0_12 = arith.constant 0 : index
    %c0_13 = arith.constant 0 : index
    %17 = vector.load %arg6[%c0_12, %c0_13] : memref<128x128xbf16, #tpu.memory_space<vmem>>, vector<128x128xbf16>
    %c0_14 = arith.constant 0 : index
    %c0_15 = arith.constant 0 : index
    %18 = vector.load %arg7[%c0_14, %c0_15] : memref<1x128xf32, #tpu.memory_space<vmem>>, vector<1x128xf32>
    %19 = arith.truncf %16 : vector<8x128xf32> to vector<8x128xbf16>
    %cst_16 = arith.constant dense<0.000000e+00> : vector<8x128xf32>
    %20 = tpu.matmul %19, %17, %cst_16 {dimension_numbers = #tpu.dot_dimension_numbers<[1], [0], [0], [1], [0, 0, 1, 1], [], []>} : vector<8x128xbf16>, vector<128x128xbf16>, vector<8x128xf32> -> vector<8x128xf32>
    %21 = vector.broadcast %18 : vector<1x128xf32> to vector<8x128xf32>
    %22 = arith.addf %20, %21 : vector<8x128xf32>
    %c0_17 = arith.constant 0 : index
    %c0_18 = arith.constant 0 : index
    %23 = vector.load %arg8[%c0_17, %c0_18] : memref<8x128xf32, #tpu.memory_space<vmem>>, vector<8x128xf32>
    tpu.vector_store %arg8[%c0_17, %c0_18], %22 {strides = array<i32>} : memref<8x128xf32, #tpu.memory_space<vmem>>, vector<8x128xf32>,
    return
  }
  func.func @transform_0(%arg0: i32) -> (i32, i32) {
    %c0_i32 = arith.constant 0 : i32
    %c0_i32_0 = arith.constant 0 : i32
    return %arg0, %c0_i32 : i32, i32
  }
  func.func @transform_1(%arg0: i32) -> (i32, i32) {
    %c0_i32 = arith.constant 0 : i32
    %c0_i32_0 = arith.constant 0 : i32
    %c0_i32_1 = arith.constant 0 : i32
    return %c0_i32, %c0_i32_0 : i32, i32
  }
  func.func @transform_2(%arg0: i32) -> (i32, i32) {
    %c0_i32 = arith.constant 0 : i32
    %c0_i32_0 = arith.constant 0 : i32
    %c0_i32_1 = arith.constant 0 : i32
    return %c0_i32, %c0_i32_0 : i32, i32
  }
  func.func @transform_3(%arg0: i32) -> (i32, i32) {
    %c0_i32 = arith.constant 0 : i32
    %c0_i32_0 = arith.constant 0 : i32
    %c0_i32_1 = arith.constant 0 : i32
    return %c0_i32, %c0_i32_0 : i32, i32
  }
  func.func @transform_4(%arg0: i32) -> (i32, i32) {
    %c0_i32 = arith.constant 0 : i32
    %c0_i32_0 = arith.constant 0 : i32
    %c0_i32_1 = arith.constant 0 : i32
    return %c0_i32, %c0_i32_0 : i32, i32
  }
  func.func @transform_5(%arg0: i32) -> (i32, i32) {
    %c0_i32 = arith.constant 0 : i32
    %c0_i32_0 = arith.constant 0 : i32
    %c0_i32_1 = arith.constant 0 : i32
    return %c0_i32, %c0_i32_0 : i32, i32
  }
  func.func @transform_6(%arg0: i32) -> (i32, i32) {
    %c0_i32 = arith.constant 0 : i32
    %c0_i32_0 = arith.constant 0 : i32
    %c0_i32_1 = arith.constant 0 : i32
    return %c0_i32, %c0_i32_0 : i32, i32
  }
  func.func @transform_7(%arg0: i32) -> (i32, i32) {
    %c0_i32 = arith.constant 0 : i32
    %c0_i32_0 = arith.constant 0 : i32
    return %arg0, %c0_i32 : i32, i32
  }
}

module attributes {stable_mosaic.version = 11 : i64} {
  func.func @_mlp_fused_kernel(%arg0: i32, %arg1: memref<8x32xf32, #tpu.memory_space<vmem>>, %arg2: memref<32x128xbf16, #tpu.memory_space<vmem>>, %arg3: memref<1x128xf32, #tpu.memory_space<vmem>>, %arg4: memref<128x128xbf16, #tpu.memory_space<vmem>>, %arg5: memref<1x128xf32, #tpu.memory_space<vmem>>, %arg6: memref<128x128xbf16, #tpu.memory_space<vmem>>, %arg7: memref<1x128xf32, #tpu.memory_space<vmem>>, %arg8: memref<8x128xf32, #tpu.memory_space<vmem>>) attributes {dimension_semantics = [#tpu.dimension_semantics<parallel>], iteration_bounds = array<i64: 1>, scalar_prefetch = 0 : i64, scratch_operands = 0 : i64, tpu.core_type = #tpu.core_type<tc>, window_params = [{transform_indices = @transform_0, window_bounds = array<i64: 8, 32>}, {pipeline_mode = #tpu.pipeline_mode<synchronous>, transform_indices = @transform_1, window_bounds = array<i64: 32, 128>}, {pipeline_mode = #tpu.pipeline_mode<synchronous>, transform_indices = @transform_2, window_bounds = array<i64: 1, 128>}, {pipeline_mode = #tpu.pipeline_mode<synchronous>, transform_indices = @transform_3, window_bounds = array<i64: 128, 128>}, {pipeline_mode = #tpu.pipeline_mode<synchronous>, transform_indices = @transform_4, window_bounds = array<i64: 1, 128>}, {pipeline_mode = #tpu.pipeline_mode<synchronous>, transform_indices = @transform_5, window_bounds = array<i64: 128, 128>}, {pipeline_mode = #tpu.pipeline_mode<synchronous>, transform_indices = @transform_6, window_bounds = array<i64: 1, 128>}, {transform_indices = @transform_7, window_bounds = array<i64: 8, 128>}]} {
    %c0 = arith.constant 0 : index
    %c0_0 = arith.constant 0 : index
    %0 = vector.load %arg1[%c0, %c0_0] : memref<8x32xf32, #tpu.memory_space<vmem>>, vector<8x32xf32>
    %c0_1 = arith.constant 0 : index
    %c0_2 = arith.constant 0 : index
    %1 = vector.load %arg2[%c0_1, %c0_2] : memref<32x128xbf16, #tpu.memory_space<vmem>>, vector<32x128xbf16>
    %c0_3 = arith.constant 0 : index
    %c0_4 = arith.constant 0 : index
    %2 = vector.load %arg3[%c0_3, %c0_4] : memref<1x128xf32, #tpu.memory_space<vmem>>, vector<1x128xf32>
    %3 = arith.truncf %0 : vector<8x32xf32> to vector<8x32xbf16>
    %cst = arith.constant dense<0.000000e+00> : vector<8x128xf32>
    %4 = tpu.matmul %3, %1, %cst {dimension_numbers = #tpu.dot_dimension_numbers<[1], [0], [0], [1], [0, 0, 1, 1], [], []>} : vector<8x32xbf16>, vector<32x128xbf16>, vector<8x128xf32> -> vector<8x128xf32>
    %5 = vector.broadcast %2 : vector<1x128xf32> to vector<8x128xf32>
    %6 = arith.addf %4, %5 : vector<8x128xf32>
    %cst_5 = arith.constant 0.000000e+00 : f32
    %7 = vector.broadcast %cst_5 : f32 to vector<8x128xf32>
    %8 = arith.maximumf %6, %7 : vector<8x128xf32>
    %c0_6 = arith.constant 0 : index
    %c0_7 = arith.constant 0 : index
    %9 = vector.load %arg4[%c0_6, %c0_7] : memref<128x128xbf16, #tpu.memory_space<vmem>>, vector<128x128xbf16>
    %c0_8 = arith.constant 0 : index
    %c0_9 = arith.constant 0 : index
    %10 = vector.load %arg5[%c0_8, %c0_9] : memref<1x128xf32, #tpu.memory_space<vmem>>, vector<1x128xf32>
    %11 = arith.truncf %8 : vector<8x128xf32> to vector<8x128xbf16>
    %cst_10 = arith.constant dense<0.000000e+00> : vector<8x128xf32>
    %12 = tpu.matmul %11, %9, %cst_10 {dimension_numbers = #tpu.dot_dimension_numbers<[1], [0], [0], [1], [0, 0, 1, 1], [], []>} : vector<8x128xbf16>, vector<128x128xbf16>, vector<8x128xf32> -> vector<8x128xf32>
    %13 = vector.broadcast %10 : vector<1x128xf32> to vector<8x128xf32>
    %14 = arith.addf %12, %13 : vector<8x128xf32>
    %cst_11 = arith.constant 0.000000e+00 : f32
    %15 = vector.broadcast %cst_11 : f32 to vector<8x128xf32>
    %16 = arith.maximumf %14, %15 : vector<8x128xf32>
    %c0_12 = arith.constant 0 : index
    %c0_13 = arith.constant 0 : index
    %17 = vector.load %arg6[%c0_12, %c0_13] : memref<128x128xbf16, #tpu.memory_space<vmem>>, vector<128x128xbf16>
    %c0_14 = arith.constant 0 : index
    %c0_15 = arith.constant 0 : index
    %18 = vector.load %arg7[%c0_14, %c0_15] : memref<1x128xf32, #tpu.memory_space<vmem>>, vector<1x128xf32>
    %19 = arith.truncf %16 : vector<8x128xf32> to vector<8x128xbf16>
    %cst_16 = arith.constant dense<0.000000e+00> : vector<8x128xf32>
    %20 = tpu.matmul %19, %17, %cst_16 {dimension_numbers = #tpu.dot_dimension_numbers<[1], [0], [0], [1], [0, 0, 1, 1], [], []>} : vector<8x128xbf16>, vector<128x128xbf16>, vector<8x128xf32> -> vector<8x128xf32>
    %21 = vector.broadcast %18 : vector<1x128xf32> to vector<8x128xf32>
    %22 = arith.addf %20, %21 : vector<8x128xf32>
    %c0_17 = arith.constant 0 : index
    %c0_18 = arith.constant 0 : index
    %23 = vector.load %arg8[%c0_17, %c0_18] : memref<8x128xf32, #tpu.memory_space<vmem>>, vector<8x128xf32>
    tpu.vector_store %arg8[%c0_17, %c0_18], %22 {strides = array<i32>} : memref<8x128xf32, #tpu.memory_space<vmem>>, vector<8x128xf32>,
    return
  }
  func.func @transform_0(%arg0: i32) -> (i32, i32) {
    %c0_i32 = arith.constant 0 : i32
    %c0_i32_0 = arith.constant 0 : i32
    return %arg0, %c0_i32 : i32, i32
  }
  func.func @transform_1(%arg0: i32) -> (i32, i32) {
    %c0_i32 = arith.constant 0 : i32
    %c0_i32_0 = arith.constant 0 : i32
    %c0_i32_1 = arith.constant 0 : i32
    return %c0_i32, %c0_i32_0 : i32, i32
  }
  func.func @transform_2(%arg0: i32) -> (i32, i32) {
    %c0_i32 = arith.constant 0 : i32
    %c0_i32_0 = arith.constant 0 : i32
    %c0_i32_1 = arith.constant 0 : i32
    return %c0_i32, %c0_i32_0 : i32, i32
  }
  func.func @transform_3(%arg0: i32) -> (i32, i32) {
    %c0_i32 = arith.constant 0 : i32
    %c0_i32_0 = arith.constant 0 : i32
    %c0_i32_1 = arith.constant 0 : i32
    return %c0_i32, %c0_i32_0 : i32, i32
  }
  func.func @transform_4(%arg0: i32) -> (i32, i32) {
    %c0_i32 = arith.constant 0 : i32
    %c0_i32_0 = arith.constant 0 : i32
    %c0_i32_1 = arith.constant 0 : i32
    return %c0_i32, %c0_i32_0 : i32, i32
  }
  func.func @transform_5(%arg0: i32) -> (i32, i32) {
    %c0_i32 = arith.constant 0 : i32
    %c0_i32_0 = arith.constant 0 : i32
    %c0_i32_1 = arith.constant 0 : i32
    return %c0_i32, %c0_i32_0 : i32, i32
  }
  func.func @transform_6(%arg0: i32) -> (i32, i32) {
    %c0_i32 = arith.constant 0 : i32
    %c0_i32_0 = arith.constant 0 : i32
    %c0_i32_1 = arith.constant 0 : i32
    return %c0_i32, %c0_i32_0 : i32, i32
  }
  func.func @transform_7(%arg0: i32) -> (i32, i32) {
    %c0_i32 = arith.constant 0 : i32
    %c0_i32_0 = arith.constant 0 : i32
    return %arg0, %c0_i32 : i32, i32
  }
}

</mosaic_0001>

<llo_original>
// kernel: tpu_custom_call.1
$region0: #{tpu_custom_call.1}
  #allocation0 [shape = 'u32[]', space=smem, size = 0x4, offset = 0x4, fixed_abs, tag = 'smem constant byte address 0x4 - core index']
  #allocation1 [shape = 'u32[72,128]{1,0:T(1,128)}', space=vmem, size = 0x9000, scoped, tag = 'internal scratch']
  %s0 = inlined_call_operand.hbm [shape: f32[8,32], index: 0, kind: input, shape index: {}]
  %s1 = inlined_call_operand.hbm [shape: bf16[32,128], index: 1, kind: input, shape index: {}]
  %s2 = inlined_call_operand.vmem [shape: f32[1,128], index: 2, kind: input, shape index: {}]
  %s3 = inlined_call_operand.hbm [shape: bf16[128,128], index: 3, kind: input, shape index: {}]
  %s4 = inlined_call_operand.vmem [shape: f32[1,128], index: 4, kind: input, shape index: {}]
  %s5 = inlined_call_operand.hbm [shape: bf16[128,128], index: 5, kind: input, shape index: {}]
  %s6 = inlined_call_operand.vmem [shape: f32[1,128], index: 6, kind: input, shape index: {}]
  %s7 = inlined_call_operand.hbm [shape: f32[8,128], index: 7, kind: output, shape index: {}]
  %s8 = sld [smem:[#allocation0]]
  $region54: #{tpu_custom_call.1} parent=0
    _
  %s10 = ssub.s32 1, %s8
  %s11 = scalar_select 0, %s10, %s8
  $region1: #{tpu_custom_call.1} parent=0
    #allocation2 [shape = 'u8[4096]{0}', space=vmem, size = 0x1000, scoped, tag = 'input window, operand 0, single buffered']
    #allocation3 [shape = 's32[1]{0}', space=sflag, size = 0x4, scoped, tag = 'scoped memory for tpu_custom_call.1']
    #allocation4 [shape = 's32[1]{0}', space=sflag, size = 0x4, scoped, tag = 'scoped memory for tpu_custom_call.1']
    #allocation5 [shape = 'u8[8192]{0}', space=vmem, size = 0x2000, scoped, tag = 'input window, operand 1, single buffered']
    #allocation6 [shape = 's32[1]{0}', space=sflag, size = 0x4, scoped, tag = 'scoped memory for tpu_custom_call.1']
    #allocation7 [shape = 'u8[32768]{0}', space=vmem, size = 0x8000, scoped, tag = 'input window, operand 3, single buffered']
    #allocation8 [shape = 'u8[32768]{0}', space=vmem, size = 0x8000, scoped, tag = 'input window, operand 5, single buffered']
    #allocation9 [shape = 's32[1]{0}', space=sflag, size = 0x4, scoped, tag = 'scoped memory for tpu_custom_call.1']
    #allocation10 [shape = 'u8[4096]{0}', space=vmem, size = 0x1000, scoped, tag = 'output window, operand 0, single buffered']
    %12 = vsyncpa [#allocation3], 0
    %13 = vsyncpa [#allocation6], 0
    %14 = vsyncpa [#allocation9], 0
    %15 = vsyncpa [#allocation4], 0
    // Predicated region
    $region2: #{tpu_custom_call.1} parent=1 // pred_check
      _
    $region3: #{tpu_custom_call.1} parent=1 // pred_check_branch
      %17 = sbr.rel (0) target = $region5
    $region4: #{tpu_custom_call.1} parent=1 // pred_region
      %19 = vsyncadd [#allocation3], 0
      %s21 = sshll.u32 %s0, 4
      %s22 = int_to_ptr.hbm [resolvable:$true] %s21
      %s23 = sshll.u32 [#allocation2], 4
      %s24 = int_to_ptr.vmem [resolvable:$true] %s23
      %26 = dma.hbm_to_vmem [thread:$0]  %s22, 128, %s24, [#allocation3]
    $region5: #{tpu_custom_call.1} parent=1 // pred_fallthru
      _
    // Predicated region
    $region6: #{tpu_custom_call.1} parent=1 // pred_check
      _
    $region7: #{tpu_custom_call.1} parent=1 // pred_check_branch
      %28 = sbr.rel (0) target = $region9
    $region8: #{tpu_custom_call.1} parent=1 // pred_region
      %30 = vsyncadd [#allocation6], 0
      %s31 = sshll.u32 %s1, 4
      %s32 = int_to_ptr.hbm [resolvable:$true] %s31
      %s33 = sshll.u32 [#allocation5], 4
      %s34 = int_to_ptr.vmem [resolvable:$true] %s33
      %39 = dma.hbm_to_vmem [thread:$0]  %s32, 256, %s34, [#allocation6], 64, 64, 4
    $region9: #{tpu_custom_call.1} parent=1 // pred_fallthru
      _
    // Predicated region
    $region10: #{tpu_custom_call.1} parent=1 // pred_check
      _
    $region11: #{tpu_custom_call.1} parent=1 // pred_check_branch
      %41 = sbr.rel (0) target = $region13
    $region12: #{tpu_custom_call.1} parent=1 // pred_region
      _
    $region13: #{tpu_custom_call.1} parent=1 // pred_fallthru
      _
    // Predicated region
    $region14: #{tpu_custom_call.1} parent=1 // pred_check
      _
    $region15: #{tpu_custom_call.1} parent=1 // pred_check_branch
      %43 = sbr.rel (0) target = $region17
    $region16: #{tpu_custom_call.1} parent=1 // pred_region
      %45 = vsyncadd [#allocation6], 0
      %s46 = sshll.u32 %s3, 4
      %s47 = int_to_ptr.hbm [resolvable:$true] %s46
      %s48 = sshll.u32 [#allocation7], 4
      %s49 = int_to_ptr.vmem [resolvable:$true] %s48
      %54 = dma.hbm_to_vmem [thread:$0]  %s47, 1024, %s49, [#allocation6], 64, 64, 4
    $region17: #{tpu_custom_call.1} parent=1 // pred_fallthru
      _
    // Predicated region
    $region18: #{tpu_custom_call.1} parent=1 // pred_check
      _
    $region19: #{tpu_custom_call.1} parent=1 // pred_check_branch
      %56 = sbr.rel (0) target = $region21
    $region20: #{tpu_custom_call.1} parent=1 // pred_region
      _
    $region21: #{tpu_custom_call.1} parent=1 // pred_fallthru
      _
    // Predicated region
    $region22: #{tpu_custom_call.1} parent=1 // pred_check
      _
    $region23: #{tpu_custom_call.1} parent=1 // pred_check_branch
      %58 = sbr.rel (0) target = $region25
    $region24: #{tpu_custom_call.1} parent=1 // pred_region
      %60 = vsyncadd [#allocation9], 0
      %s61 = sshll.u32 %s5, 4
      %s62 = int_to_ptr.hbm [resolvable:$true] %s61
      %s63 = sshll.u32 [#allocation8], 4
      %s64 = int_to_ptr.vmem [resolvable:$true] %s63
      %69 = dma.hbm_to_vmem [thread:$0]  %s62, 1024, %s64, [#allocation9], 64, 64, 4
    $region25: #{tpu_custom_call.1} parent=1 // pred_fallthru
      _
    // Predicated region
    $region26: #{tpu_custom_call.1} parent=1 // pred_check
      _
    $region27: #{tpu_custom_call.1} parent=1 // pred_check_branch
      %71 = sbr.rel (0) target = $region29
    $region28: #{tpu_custom_call.1} parent=1 // pred_region
      _
    $region29: #{tpu_custom_call.1} parent=1 // pred_fallthru
      _
    // Predicated region
    $region30: #{tpu_custom_call.1} parent=1 // pred_check
      _
    $region31: #{tpu_custom_call.1} parent=1 // pred_check_branch
      %73 = sbr.rel (0) target = $region33
    $region32: #{tpu_custom_call.1} parent=1 // pred_region
      %75 = dma.done [#allocation3], 128
    $region33: #{tpu_custom_call.1} parent=1 // pred_fallthru
      _
    // Predicated region
    $region34: #{tpu_custom_call.1} parent=1 // pred_check
      _
    $region35: #{tpu_custom_call.1} parent=1 // pred_check_branch
      %77 = sbr.rel (0) target = $region37
    $region36: #{tpu_custom_call.1} parent=1 // pred_region
      %79 = dma.done [#allocation6], 256
    $region37: #{tpu_custom_call.1} parent=1 // pred_fallthru
      _
    // Predicated region
    $region38: #{tpu_custom_call.1} parent=1 // pred_check
      _
    $region39: #{tpu_custom_call.1} parent=1 // pred_check_branch
      %81 = sbr.rel (0) target = $region41
    $region40: #{tpu_custom_call.1} parent=1 // pred_region
      %83 = dma.done [#allocation6], 1024
    $region41: #{tpu_custom_call.1} parent=1 // pred_fallthru
      _
    // Predicated region
    $region42: #{tpu_custom_call.1} parent=1 // pred_check
      _
    $region43: #{tpu_custom_call.1} parent=1 // pred_check_branch
      %85 = sbr.rel (0) target = $region45
    $region44: #{tpu_custom_call.1} parent=1 // pred_region
      %87 = dma.done [#allocation9], 1024
    $region45: #{tpu_custom_call.1} parent=1 // pred_fallthru
      _
    %v89 = vld [vmem:[#allocation2] sm:$0xff]
    %v90 = vld [vmem:[#allocation5] sm:$0xf]
    %v91 = vld [vmem:[#allocation5 + $0x4] sm:$0xf]
    %v92 = vld [vmem:[#allocation5 + $0x8] sm:$0xf]
    %v93 = vld [vmem:[#allocation5 + $0xc] sm:$0xf]
    %v94 = vld [vmem:[%s2] sm:$0x1]
    %v95 = vpack.c.bf16 %v89, %v89
    %v97 = vperm.slane %v94, 0
    %v103 = vunpack.c.l.b16 %v90
    %v104 = vunpack.c.l.b16 %v91
    %v105 = vunpack.c.l.b16 %v92
    %v106 = vunpack.c.l.b16 %v93
    %v107 = vpack.c.b16 %v104, %v103
    %v108 = vpack.c.b16 %v106, %v105
    %vm111 = vcmask 261120
    %v113 = vsel %vm111, %v95, 0
    %115 = vmatpush.bf16.msra.mxu0 0
    %116 = vmatpush.bf16.msra.mxu0 0
    %117 = vmatpush.bf16.msra.mxu0 0
    %118 = vmatpush.bf16.msra.mxu0 0
    %119 = vmatpush.bf16.msra.mxu0 0
    %120 = vmatpush.bf16.msra.mxu0 0
    %121 = vmatpush.bf16.msra.mxu0 %v108
    %122 = vmatpush.bf16.msra.mxu0 %v107
    %123 = vmatmul.bf16.gmra.mxu0 %v113
    %v124 = vpop.f32.mrf.mxu0
    %v125 = vadd.f32 %v97, %v124
    %v126 = vpop.f32.mrf.mxu0
    %127 = vdwg.mxu0
    %v128 = vmax.f32 %v125, 0.0
    %v129 = vld [vmem:[#allocation7] sm:$0xf]
    %v130 = vld [vmem:[#allocation7 + $0x4] sm:$0xf]
    %v131 = vld [vmem:[#allocation7 + $0x8] sm:$0xf]
    %v132 = vld [vmem:[#allocation7 + $0xc] sm:$0xf]
    %v133 = vld [vmem:[#allocation7 + $0x10] sm:$0xf]
    %v134 = vld [vmem:[#allocation7 + $0x14] sm:$0xf]
    %v135 = vld [vmem:[#allocation7 + $0x18] sm:$0xf]
    %v136 = vld [vmem:[#allocation7 + $0x1c] sm:$0xf]
    %v137 = vld [vmem:[#allocation7 + $0x20] sm:$0xf]
    %v138 = vld [vmem:[#allocation7 + $0x24] sm:$0xf]
    %v139 = vld [vmem:[#allocation7 + $0x28] sm:$0xf]
    %v140 = vld [vmem:[#allocation7 + $0x2c] sm:$0xf]
    %v141 = vld [vmem:[#allocation7 + $0x30] sm:$0xf]
    %v142 = vld [vmem:[#allocation7 + $0x34] sm:$0xf]
    %v143 = vld [vmem:[#allocation7 + $0x38] sm:$0xf]
    %v144 = vld [vmem:[#allocation7 + $0x3c] sm:$0xf]
    %v145 = vld [vmem:[%s4] sm:$0x1]
    %v146 = vpack.c.bf16 %v128, %v128
    %v148 = vperm.slane %v145, 0
    %v166 = vunpack.c.l.b16 %v129
    %v167 = vunpack.c.l.b16 %v130
    %v168 = vunpack.c.l.b16 %v131
    %v169 = vunpack.c.l.b16 %v132
    %v170 = vunpack.c.l.b16 %v133
    %v171 = vunpack.c.l.b16 %v134
    %v172 = vunpack.c.l.b16 %v135
    %v173 = vunpack.c.l.b16 %v136
    %v174 = vunpack.c.l.b16 %v137
    %v175 = vunpack.c.l.b16 %v138
    %v176 = vunpack.c.l.b16 %v139
    %v177 = vunpack.c.l.b16 %v140
    %v178 = vunpack.c.l.b16 %v141
    %v179 = vunpack.c.l.b16 %v142
    %v180 = vunpack.c.l.b16 %v143
    %v181 = vunpack.c.l.b16 %v144
    %v182 = vpack.c.b16 %v167, %v166
    %v183 = vpack.c.b16 %v169, %v168
    %v184 = vpack.c.b16 %v171, %v170
    %v185 = vpack.c.b16 %v173, %v172
    %v186 = vpack.c.b16 %v175, %v174
    %v187 = vpack.c.b16 %v177, %v176
    %v188 = vpack.c.b16 %v179, %v178
    %v189 = vpack.c.b16 %v181, %v180
    %198 = vmatpush.bf16.msra.mxu0 %v189
    %199 = vmatpush.bf16.msra.mxu0 %v188
    %200 = vmatpush.bf16.msra.mxu0 %v187
    %201 = vmatpush.bf16.msra.mxu0 %v186
    %202 = vmatpush.bf16.msra.mxu0 %v185
    %203 = vmatpush.bf16.msra.mxu0 %v184
    %204 = vmatpush.bf16.msra.mxu0 %v183
    %205 = vmatpush.bf16.msra.mxu0 %v182
    %206 = vmatmul.bf16.gmra.mxu0 %v146
    %v207 = vpop.f32.mrf.mxu0
    %v208 = vadd.f32 %v148, %v207
    %v209 = vpop.f32.mrf.mxu0
    %210 = vdwg.mxu0
    %v211 = vmax.f32 %v208, 0.0
    %v212 = vld [vmem:[#allocation8] sm:$0xf]
    %v213 = vld [vmem:[#allocation8 + $0x4] sm:$0xf]
    %v214 = vld [vmem:[#allocation8 + $0x8] sm:$0xf]
    %v215 = vld [vmem:[#allocation8 + $0xc] sm:$0xf]
    %v216 = vld [vmem:[#allocation8 + $0x10] sm:$0xf]
    %v217 = vld [vmem:[#allocation8 + $0x14] sm:$0xf]
    %v218 = vld [vmem:[#allocation8 + $0x18] sm:$0xf]
    %v219 = vld [vmem:[#allocation8 + $0x1c] sm:$0xf]
    %v220 = vld [vmem:[#allocation8 + $0x20] sm:$0xf]
    %v221 = vld [vmem:[#allocation8 + $0x24] sm:$0xf]
    %v222 = vld [vmem:[#allocation8 + $0x28] sm:$0xf]
    %v223 = vld [vmem:[#allocation8 + $0x2c] sm:$0xf]
    %v224 = vld [vmem:[#allocation8 + $0x30] sm:$0xf]
    %v225 = vld [vmem:[#allocation8 + $0x34] sm:$0xf]
    %v226 = vld [vmem:[#allocation8 + $0x38] sm:$0xf]
    %v227 = vld [vmem:[#allocation8 + $0x3c] sm:$0xf]
    %v228 = vld [vmem:[%s6] sm:$0x1]
    %v229 = vpack.c.bf16 %v211, %v211
    %v231 = vperm.slane %v228, 0
    %v249 = vunpack.c.l.b16 %v212
    %v250 = vunpack.c.l.b16 %v213
    %v251 = vunpack.c.l.b16 %v214
    %v252 = vunpack.c.l.b16 %v215
    %v253 = vunpack.c.l.b16 %v216
    %v254 = vunpack.c.l.b16 %v217
    %v255 = vunpack.c.l.b16 %v218
    %v256 = vunpack.c.l.b16 %v219
    %v257 = vunpack.c.l.b16 %v220
    %v258 = vunpack.c.l.b16 %v221
    %v259 = vunpack.c.l.b16 %v222
    %v260 = vunpack.c.l.b16 %v223
    %v261 = vunpack.c.l.b16 %v224
    %v262 = vunpack.c.l.b16 %v225
    %v263 = vunpack.c.l.b16 %v226
    %v264 = vunpack.c.l.b16 %v227
    %v265 = vpack.c.b16 %v250, %v249
    %v266 = vpack.c.b16 %v252, %v251
    %v267 = vpack.c.b16 %v254, %v253
    %v268 = vpack.c.b16 %v256, %v255
    %v269 = vpack.c.b16 %v258, %v257
    %v270 = vpack.c.b16 %v260, %v259
    %v271 = vpack.c.b16 %v262, %v261
    %v272 = vpack.c.b16 %v264, %v263
    %281 = vmatpush.bf16.msra.mxu0 %v272
    %282 = vmatpush.bf16.msra.mxu0 %v271
    %283 = vmatpush.bf16.msra.mxu0 %v270
    %284 = vmatpush.bf16.msra.mxu0 %v269
    %285 = vmatpush.bf16.msra.mxu0 %v268
    %286 = vmatpush.bf16.msra.mxu0 %v267
    %287 = vmatpush.bf16.msra.mxu0 %v266
    %288 = vmatpush.bf16.msra.mxu0 %v265
    %289 = vmatmul.bf16.gmra.mxu0 %v229
    %v290 = vpop.f32.mrf.mxu0
    %v291 = vadd.f32 %v231, %v290
    %v292 = vpop.f32.mrf.mxu0
    %293 = vdwg.mxu0
    %294 = vst [vmem:[#allocation10] sm:$0xff] %v291
    // Predicated region
    $region46: #{tpu_custom_call.1} parent=1 // pred_check
      _
    $region47: #{tpu_custom_call.1} parent=1 // pred_check_branch
      %296 = sbr.rel (0) target = $region49
    $region48: #{tpu_custom_call.1} parent=1 // pred_region
      %298 = vsyncadd [#allocation4], 0
      %s300 = sshll.u32 [#allocation10], 4
      %s301 = int_to_ptr.vmem [resolvable:$true] %s300
      %s302 = sshll.u32 %s7, 4
      %s303 = int_to_ptr.hbm [resolvable:$true] %s302
      %305 = dma.vmem_to_hbm [thread:$0]  %s301, 128, %s303, [#allocation4]
    $region49: #{tpu_custom_call.1} parent=1 // pred_fallthru
      _
    // Predicated region
    $region50: #{tpu_custom_call.1} parent=1 // pred_check
      _
    $region51: #{tpu_custom_call.1} parent=1 // pred_check_branch
      %307 = sbr.rel (0) target = $region53
    $region52: #{tpu_custom_call.1} parent=1 // pred_region
      %309 = dma.done [#allocation4], 128
    $region53: #{tpu_custom_call.1} parent=1 // pred_fallthru
      _
    %310 = vsyncpa [#allocation3], 1
    %311 = vsyncpa [#allocation6], 1
    %312 = vsyncpa [#allocation9], 1
    %313 = vsyncpa [#allocation4], 1

// kernel: tpu_custom_call.1
$region0: #{tpu_custom_call.1}
  #allocation0 [shape = 'u32[]', space=smem, size = 0x4, offset = 0x4, fixed_abs, tag = 'smem constant byte address 0x4 - core index']
  #allocation1 [shape = 'u32[72,128]{1,0:T(1,128)}', space=vmem, size = 0x9000, scoped, tag = 'internal scratch']
  %s0 = inlined_call_operand.hbm [shape: f32[8,32], index: 0, kind: input, shape index: {}]
  %s1 = inlined_call_operand.hbm [shape: bf16[32,128], index: 1, kind: input, shape index: {}]
  %s2 = inlined_call_operand.vmem [shape: f32[1,128], index: 2, kind: input, shape index: {}]
  %s3 = inlined_call_operand.hbm [shape: bf16[128,128], index: 3, kind: input, shape index: {}]
  %s4 = inlined_call_operand.vmem [shape: f32[1,128], index: 4, kind: input, shape index: {}]
  %s5 = inlined_call_operand.hbm [shape: bf16[128,128], index: 5, kind: input, shape index: {}]
  %s6 = inlined_call_operand.vmem [shape: f32[1,128], index: 6, kind: input, shape index: {}]
  %s7 = inlined_call_operand.hbm [shape: f32[8,128], index: 7, kind: output, shape index: {}]
  %s8 = sld [smem:[#allocation0]]
  $region54: #{tpu_custom_call.1} parent=0
    _
  %s10 = ssub.s32 1, %s8
  %s11 = scalar_select 0, %s10, %s8
  $region1: #{tpu_custom_call.1} parent=0
    #allocation2 [shape = 'u8[4096]{0}', space=vmem, size = 0x1000, scoped, tag = 'input window, operand 0, single buffered']
    #allocation3 [shape = 's32[1]{0}', space=sflag, size = 0x4, scoped, tag = 'scoped memory for tpu_custom_call.1']
    #allocation4 [shape = 's32[1]{0}', space=sflag, size = 0x4, scoped, tag = 'scoped memory for tpu_custom_call.1']
    #allocation5 [shape = 'u8[8192]{0}', space=vmem, size = 0x2000, scoped, tag = 'input window, operand 1, single buffered']
    #allocation6 [shape = 's32[1]{0}', space=sflag, size = 0x4, scoped, tag = 'scoped memory for tpu_custom_call.1']
    #allocation7 [shape = 'u8[32768]{0}', space=vmem, size = 0x8000, scoped, tag = 'input window, operand 3, single buffered']
    #allocation8 [shape = 'u8[32768]{0}', space=vmem, size = 0x8000, scoped, tag = 'input window, operand 5, single buffered']
    #allocation9 [shape = 's32[1]{0}', space=sflag, size = 0x4, scoped, tag = 'scoped memory for tpu_custom_call.1']
    #allocation10 [shape = 'u8[4096]{0}', space=vmem, size = 0x1000, scoped, tag = 'output window, operand 0, single buffered']
    %12 = vsyncpa [#allocation3], 0
    %13 = vsyncpa [#allocation6], 0
    %14 = vsyncpa [#allocation9], 0
    %15 = vsyncpa [#allocation4], 0
    // Predicated region
    $region2: #{tpu_custom_call.1} parent=1 // pred_check
      _
    $region3: #{tpu_custom_call.1} parent=1 // pred_check_branch
      %17 = sbr.rel (0) target = $region5
    $region4: #{tpu_custom_call.1} parent=1 // pred_region
      %19 = vsyncadd [#allocation3], 0
      %s21 = sshll.u32 %s0, 4
      %s22 = int_to_ptr.hbm [resolvable:$true] %s21
      %s23 = sshll.u32 [#allocation2], 4
      %s24 = int_to_ptr.vmem [resolvable:$true] %s23
      %26 = dma.hbm_to_vmem [thread:$0]  %s22, 128, %s24, [#allocation3]
    $region5: #{tpu_custom_call.1} parent=1 // pred_fallthru
      _
    // Predicated region
    $region6: #{tpu_custom_call.1} parent=1 // pred_check
      _
    $region7: #{tpu_custom_call.1} parent=1 // pred_check_branch
      %28 = sbr.rel (0) target = $region9
    $region8: #{tpu_custom_call.1} parent=1 // pred_region
      %30 = vsyncadd [#allocation6], 0
      %s31 = sshll.u32 %s1, 4
      %s32 = int_to_ptr.hbm [resolvable:$true] %s31
      %s33 = sshll.u32 [#allocation5], 4
      %s34 = int_to_ptr.vmem [resolvable:$true] %s33
      %39 = dma.hbm_to_vmem [thread:$0]  %s32, 256, %s34, [#allocation6], 64, 64, 4
    $region9: #{tpu_custom_call.1} parent=1 // pred_fallthru
      _
    // Predicated region
    $region10: #{tpu_custom_call.1} parent=1 // pred_check
      _
    $region11: #{tpu_custom_call.1} parent=1 // pred_check_branch
      %41 = sbr.rel (0) target = $region13
    $region12: #{tpu_custom_call.1} parent=1 // pred_region
      _
    $region13: #{tpu_custom_call.1} parent=1 // pred_fallthru
      _
    // Predicated region
    $region14: #{tpu_custom_call.1} parent=1 // pred_check
      _
    $region15: #{tpu_custom_call.1} parent=1 // pred_check_branch
      %43 = sbr.rel (0) target = $region17
    $region16: #{tpu_custom_call.1} parent=1 // pred_region
      %45 = vsyncadd [#allocation6], 0
      %s46 = sshll.u32 %s3, 4
      %s47 = int_to_ptr.hbm [resolvable:$true] %s46
      %s48 = sshll.u32 [#allocation7], 4
      %s49 = int_to_ptr.vmem [resolvable:$true] %s48
      %54 = dma.hbm_to_vmem [thread:$0]  %s47, 1024, %s49, [#allocation6], 64, 64, 4
    $region17: #{tpu_custom_call.1} parent=1 // pred_fallthru
      _
    // Predicated region
    $region18: #{tpu_custom_call.1} parent=1 // pred_check
      _
    $region19: #{tpu_custom_call.1} parent=1 // pred_check_branch
      %56 = sbr.rel (0) target = $region21
    $region20: #{tpu_custom_call.1} parent=1 // pred_region
      _
    $region21: #{tpu_custom_call.1} parent=1 // pred_fallthru
      _
    // Predicated region
    $region22: #{tpu_custom_call.1} parent=1 // pred_check
      _
    $region23: #{tpu_custom_call.1} parent=1 // pred_check_branch
      %58 = sbr.rel (0) target = $region25
    $region24: #{tpu_custom_call.1} parent=1 // pred_region
      %60 = vsyncadd [#allocation9], 0
      %s61 = sshll.u32 %s5, 4
      %s62 = int_to_ptr.hbm [resolvable:$true] %s61
      %s63 = sshll.u32 [#allocation8], 4
      %s64 = int_to_ptr.vmem [resolvable:$true] %s63
      %69 = dma.hbm_to_vmem [thread:$0]  %s62, 1024, %s64, [#allocation9], 64, 64, 4
    $region25: #{tpu_custom_call.1} parent=1 // pred_fallthru
      _
    // Predicated region
    $region26: #{tpu_custom_call.1} parent=1 // pred_check
      _
    $region27: #{tpu_custom_call.1} parent=1 // pred_check_branch
      %71 = sbr.rel (0) target = $region29
    $region28: #{tpu_custom_call.1} parent=1 // pred_region
      _
    $region29: #{tpu_custom_call.1} parent=1 // pred_fallthru
      _
    // Predicated region
    $region30: #{tpu_custom_call.1} parent=1 // pred_check
      _
    $region31: #{tpu_custom_call.1} parent=1 // pred_check_branch
      %73 = sbr.rel (0) target = $region33
    $region32: #{tpu_custom_call.1} parent=1 // pred_region
      %75 = dma.done [#allocation3], 128
    $region33: #{tpu_custom_call.1} parent=1 // pred_fallthru
      _
    // Predicated region
    $region34: #{tpu_custom_call.1} parent=1 // pred_check
      _
    $region35: #{tpu_custom_call.1} parent=1 // pred_check_branch
      %77 = sbr.rel (0) target = $region37
    $region36: #{tpu_custom_call.1} parent=1 // pred_region
      %79 = dma.done [#allocation6], 256
    $region37: #{tpu_custom_call.1} parent=1 // pred_fallthru
      _
    // Predicated region
    $region38: #{tpu_custom_call.1} parent=1 // pred_check
      _
    $region39: #{tpu_custom_call.1} parent=1 // pred_check_branch
      %81 = sbr.rel (0) target = $region41
    $region40: #{tpu_custom_call.1} parent=1 // pred_region
      %83 = dma.done [#allocation6], 1024
    $region41: #{tpu_custom_call.1} parent=1 // pred_fallthru
      _
    // Predicated region
    $region42: #{tpu_custom_call.1} parent=1 // pred_check
      _
    $region43: #{tpu_custom_call.1} parent=1 // pred_check_branch
      %85 = sbr.rel (0) target = $region45
    $region44: #{tpu_custom_call.1} parent=1 // pred_region
      %87 = dma.done [#allocation9], 1024
    $region45: #{tpu_custom_call.1} parent=1 // pred_fallthru
      _
    %v89 = vld [vmem:[#allocation2] sm:$0xff]
    %v90 = vld [vmem:[#allocation5] sm:$0xf]
    %v91 = vld [vmem:[#allocation5 + $0x4] sm:$0xf]
    %v92 = vld [vmem:[#allocation5 + $0x8] sm:$0xf]
    %v93 = vld [vmem:[#allocation5 + $0xc] sm:$0xf]
    %v94 = vld [vmem:[%s2] sm:$0x1]
    %v95 = vpack.c.bf16 %v89, %v89
    %v97 = vperm.slane %v94, 0
    %v103 = vunpack.c.l.b16 %v90
    %v104 = vunpack.c.l.b16 %v91
    %v105 = vunpack.c.l.b16 %v92
    %v106 = vunpack.c.l.b16 %v93
    %v107 = vpack.c.b16 %v104, %v103
    %v108 = vpack.c.b16 %v106, %v105
    %vm111 = vcmask 261120
    %v113 = vsel %vm111, %v95, 0
    %115 = vmatpush.bf16.msra.mxu0 0
    %116 = vmatpush.bf16.msra.mxu0 0
    %117 = vmatpush.bf16.msra.mxu0 0
    %118 = vmatpush.bf16.msra.mxu0 0
    %119 = vmatpush.bf16.msra.mxu0 0
    %120 = vmatpush.bf16.msra.mxu0 0
    %121 = vmatpush.bf16.msra.mxu0 %v108
    %122 = vmatpush.bf16.msra.mxu0 %v107
    %123 = vmatmul.bf16.gmra.mxu0 %v113
    %v124 = vpop.f32.mrf.mxu0
    %v125 = vadd.f32 %v97, %v124
    %v126 = vpop.f32.mrf.mxu0
    %127 = vdwg.mxu0
    %v128 = vmax.f32 %v125, 0.0
    %v129 = vld [vmem:[#allocation7] sm:$0xf]
    %v130 = vld [vmem:[#allocation7 + $0x4] sm:$0xf]
    %v131 = vld [vmem:[#allocation7 + $0x8] sm:$0xf]
    %v132 = vld [vmem:[#allocation7 + $0xc] sm:$0xf]
    %v133 = vld [vmem:[#allocation7 + $0x10] sm:$0xf]
    %v134 = vld [vmem:[#allocation7 + $0x14] sm:$0xf]
    %v135 = vld [vmem:[#allocation7 + $0x18] sm:$0xf]
    %v136 = vld [vmem:[#allocation7 + $0x1c] sm:$0xf]
    %v137 = vld [vmem:[#allocation7 + $0x20] sm:$0xf]
    %v138 = vld [vmem:[#allocation7 + $0x24] sm:$0xf]
    %v139 = vld [vmem:[#allocation7 + $0x28] sm:$0xf]
    %v140 = vld [vmem:[#allocation7 + $0x2c] sm:$0xf]
    %v141 = vld [vmem:[#allocation7 + $0x30] sm:$0xf]
    %v142 = vld [vmem:[#allocation7 + $0x34] sm:$0xf]
    %v143 = vld [vmem:[#allocation7 + $0x38] sm:$0xf]
    %v144 = vld [vmem:[#allocation7 + $0x3c] sm:$0xf]
    %v145 = vld [vmem:[%s4] sm:$0x1]
    %v146 = vpack.c.bf16 %v128, %v128
    %v148 = vperm.slane %v145, 0
    %v166 = vunpack.c.l.b16 %v129
    %v167 = vunpack.c.l.b16 %v130
    %v168 = vunpack.c.l.b16 %v131
    %v169 = vunpack.c.l.b16 %v132
    %v170 = vunpack.c.l.b16 %v133
    %v171 = vunpack.c.l.b16 %v134
    %v172 = vunpack.c.l.b16 %v135
    %v173 = vunpack.c.l.b16 %v136
    %v174 = vunpack.c.l.b16 %v137
    %v175 = vunpack.c.l.b16 %v138
    %v176 = vunpack.c.l.b16 %v139
    %v177 = vunpack.c.l.b16 %v140
    %v178 = vunpack.c.l.b16 %v141
    %v179 = vunpack.c.l.b16 %v142
    %v180 = vunpack.c.l.b16 %v143
    %v181 = vunpack.c.l.b16 %v144
    %v182 = vpack.c.b16 %v167, %v166
    %v183 = vpack.c.b16 %v169, %v168
    %v184 = vpack.c.b16 %v171, %v170
    %v185 = vpack.c.b16 %v173, %v172
    %v186 = vpack.c.b16 %v175, %v174
    %v187 = vpack.c.b16 %v177, %v176
    %v188 = vpack.c.b16 %v179, %v178
    %v189 = vpack.c.b16 %v181, %v180
    %198 = vmatpush.bf16.msra.mxu0 %v189
    %199 = vmatpush.bf16.msra.mxu0 %v188
    %200 = vmatpush.bf16.msra.mxu0 %v187
    %201 = vmatpush.bf16.msra.mxu0 %v186
    %202 = vmatpush.bf16.msra.mxu0 %v185
    %203 = vmatpush.bf16.msra.mxu0 %v184
    %204 = vmatpush.bf16.msra.mxu0 %v183
    %205 = vmatpush.bf16.msra.mxu0 %v182
    %206 = vmatmul.bf16.gmra.mxu0 %v146
    %v207 = vpop.f32.mrf.mxu0
    %v208 = vadd.f32 %v148, %v207
    %v209 = vpop.f32.mrf.mxu0
    %210 = vdwg.mxu0
    %v211 = vmax.f32 %v208, 0.0
    %v212 = vld [vmem:[#allocation8] sm:$0xf]
    %v213 = vld [vmem:[#allocation8 + $0x4] sm:$0xf]
    %v214 = vld [vmem:[#allocation8 + $0x8] sm:$0xf]
    %v215 = vld [vmem:[#allocation8 + $0xc] sm:$0xf]
    %v216 = vld [vmem:[#allocation8 + $0x10] sm:$0xf]
    %v217 = vld [vmem:[#allocation8 + $0x14] sm:$0xf]
    %v218 = vld [vmem:[#allocation8 + $0x18] sm:$0xf]
    %v219 = vld [vmem:[#allocation8 + $0x1c] sm:$0xf]
    %v220 = vld [vmem:[#allocation8 + $0x20] sm:$0xf]
    %v221 = vld [vmem:[#allocation8 + $0x24] sm:$0xf]
    %v222 = vld [vmem:[#allocation8 + $0x28] sm:$0xf]
    %v223 = vld [vmem:[#allocation8 + $0x2c] sm:$0xf]
    %v224 = vld [vmem:[#allocation8 + $0x30] sm:$0xf]
    %v225 = vld [vmem:[#allocation8 + $0x34] sm:$0xf]
    %v226 = vld [vmem:[#allocation8 + $0x38] sm:$0xf]
    %v227 = vld [vmem:[#allocation8 + $0x3c] sm:$0xf]
    %v228 = vld [vmem:[%s6] sm:$0x1]
    %v229 = vpack.c.bf16 %v211, %v211
    %v231 = vperm.slane %v228, 0
    %v249 = vunpack.c.l.b16 %v212
    %v250 = vunpack.c.l.b16 %v213
    %v251 = vunpack.c.l.b16 %v214
    %v252 = vunpack.c.l.b16 %v215
    %v253 = vunpack.c.l.b16 %v216
    %v254 = vunpack.c.l.b16 %v217
    %v255 = vunpack.c.l.b16 %v218
    %v256 = vunpack.c.l.b16 %v219
    %v257 = vunpack.c.l.b16 %v220
    %v258 = vunpack.c.l.b16 %v221
    %v259 = vunpack.c.l.b16 %v222
    %v260 = vunpack.c.l.b16 %v223
    %v261 = vunpack.c.l.b16 %v224
    %v262 = vunpack.c.l.b16 %v225
    %v263 = vunpack.c.l.b16 %v226
    %v264 = vunpack.c.l.b16 %v227
    %v265 = vpack.c.b16 %v250, %v249
    %v266 = vpack.c.b16 %v252, %v251
    %v267 = vpack.c.b16 %v254, %v253
    %v268 = vpack.c.b16 %v256, %v255
    %v269 = vpack.c.b16 %v258, %v257
    %v270 = vpack.c.b16 %v260, %v259
    %v271 = vpack.c.b16 %v262, %v261
    %v272 = vpack.c.b16 %v264, %v263
    %281 = vmatpush.bf16.msra.mxu0 %v272
    %282 = vmatpush.bf16.msra.mxu0 %v271
    %283 = vmatpush.bf16.msra.mxu0 %v270
    %284 = vmatpush.bf16.msra.mxu0 %v269
    %285 = vmatpush.bf16.msra.mxu0 %v268
    %286 = vmatpush.bf16.msra.mxu0 %v267
    %287 = vmatpush.bf16.msra.mxu0 %v266
    %288 = vmatpush.bf16.msra.mxu0 %v265
    %289 = vmatmul.bf16.gmra.mxu0 %v229
    %v290 = vpop.f32.mrf.mxu0
    %v291 = vadd.f32 %v231, %v290
    %v292 = vpop.f32.mrf.mxu0
    %293 = vdwg.mxu0
    %294 = vst [vmem:[#allocation10] sm:$0xff] %v291
    // Predicated region
    $region46: #{tpu_custom_call.1} parent=1 // pred_check
      _
    $region47: #{tpu_custom_call.1} parent=1 // pred_check_branch
      %296 = sbr.rel (0) target = $region49
    $region48: #{tpu_custom_call.1} parent=1 // pred_region
      %298 = vsyncadd [#allocation4], 0
      %s300 = sshll.u32 [#allocation10], 4
      %s301 = int_to_ptr.vmem [resolvable:$true] %s300
      %s302 = sshll.u32 %s7, 4
      %s303 = int_to_ptr.hbm [resolvable:$true] %s302
      %305 = dma.vmem_to_hbm [thread:$0]  %s301, 128, %s303, [#allocation4]
    $region49: #{tpu_custom_call.1} parent=1 // pred_fallthru
      _
    // Predicated region
    $region50: #{tpu_custom_call.1} parent=1 // pred_check
      _
    $region51: #{tpu_custom_call.1} parent=1 // pred_check_branch
      %307 = sbr.rel (0) target = $region53
    $region52: #{tpu_custom_call.1} parent=1 // pred_region
      %309 = dma.done [#allocation4], 128
    $region53: #{tpu_custom_call.1} parent=1 // pred_fallthru
      _
    %310 = vsyncpa [#allocation3], 1
    %311 = vsyncpa [#allocation6], 1
    %312 = vsyncpa [#allocation9], 1
    %313 = vsyncpa [#allocation4], 1

</llo_original>
